<compile_context>
chip_gen: v7x
topology: tpu7x:2x2x1
jax: 0.10.0
libtpu: 0.0.40
codegen_flags: <defaults>
</compile_context>

<pallas_src>
import jax
import jax.numpy as jnp
from jax.experimental import pallas as pl
from jax.experimental.pallas import tpu as pltpu

_SUBLANE = 8
_LANE = 128
_MIB = 1024 * 1024


# ----------------------------------------------------------------------------
# Planning helpers
# ----------------------------------------------------------------------------
def _ceil_to(n, m):
    return -(-n // m) * m


def _lane_padded_row_bytes(width, itemsize):
    """Physical VMEM bytes per row of a (rows, width) stream (lane padding)."""
    return _ceil_to(max(int(width), 1), _LANE) * int(itemsize)


def _device_plan():
    """Per-generation plan: (input_vmem_budget, vmem_limit_cap, default_parts)."""
    try:
        cap = int(pltpu.get_tpu_info().vmem_capacity_bytes)
    except Exception:      # off-TPU tracing / older jax: be conservative
        cap = 64 * _MIB
    if cap <= 80 * _MIB:
        # v7x-class: 64 MiB VMEM per TensorCore, 2 TCs per chip.
        return 12 * _MIB, 40 * _MIB, 2
    # v5e / v6e: 128 MiB VMEM, single TensorCore.
    return 28 * _MIB, 96 * _MIB, 1


def _plan_tiles(n_rows, stream_bytes_per_row, *, block_n=None,
                num_partitions=None, max_block_rows=16384):
    """Pick (block_n, parts, steps, total_tiles, vmem_limit_bytes)."""
    input_budget, limit_cap, default_parts = _device_plan()

    # Hard ceiling so even an explicit block_n cannot blow past physical VMEM.
    hard_rows = max(_SUBLANE,
                    (limit_cap - 6 * _MIB) // max(1, 2 * stream_bytes_per_row))
    if block_n is None:
        rows_fit = max(_SUBLANE,
                       input_budget // max(1, 2 * stream_bytes_per_row))
        block_n = min(rows_fit, max_block_rows)
    block_n = min(int(block_n), int(hard_rows))
    block_n = max(_SUBLANE, (block_n // _SUBLANE) * _SUBLANE)
    # Never let the block exceed the (>= 8 row) array extent.
    row_cap = max(_SUBLANE, (n_rows // _SUBLANE) * _SUBLANE)
    block_n = min(block_n, row_cap)

    total_tiles = -(-n_rows // block_n)
    parts = default_parts if num_partitions is None else int(num_partitions)
    parts = max(1, min(parts, total_tiles))
    steps = -(-total_tiles // parts)

    # Double-buffered inputs (lane-padded bytes) + (1,8,128) output + headroom.
    need = 2 * block_n * stream_bytes_per_row + 2 * _SUBLANE * _LANE * 4
    vmem_limit = int(min(limit_cap, max(need + 4 * _MIB, 16 * _MIB)))
    return block_n, parts, steps, total_tiles, vmem_limit


def _row_spec(block_rows, width, steps, total_tiles):
    last = total_tiles - 1
    # Clamp the block index so the trailing (possibly unbalanced) partition
    # never requests a fully out-of-range block; duplicated reads are masked
    # to zero contribution in the kernel (mask uses the *nominal* tile index).
    return pl.BlockSpec((block_rows, width),
                        lambda p, i: (jnp.minimum(p * steps + i, last), 0))


# ----------------------------------------------------------------------------
# Kernel helpers
# ----------------------------------------------------------------------------
def _row_mask(block_rows, n_valid):
    """(block_rows, 1) bool mask: nominal global row index < n_valid."""
    tile = pl.program_id(0) * pl.num_programs(1) + pl.program_id(1)
    rows = tile * block_rows + jax.lax.broadcasted_iota(
        jnp.int32, (block_rows, 1), 0)
    return rows < n_valid


def _masked_shifted_lse(x_ref, row_ok):
    """Sanitized (garbage tail rows zeroed) shifted logits and per-row LSE."""
    x = jnp.where(row_ok, x_ref[...].astype(jnp.float32), 0.0)
    m = jnp.max(x, axis=-1, keepdims=True)
    shifted = x - m
    lse = jnp.log(jnp.sum(jnp.exp(shifted), axis=-1, keepdims=True))
    return shifted, lse


def _accumulate(out_ref, per_row, i):
    @pl.when(i == 0)
    def _():
        out_ref[...] = jnp.zeros_like(out_ref)

    out_ref[...] += jnp.full(out_ref.shape, jnp.sum(per_row), jnp.float32)


# ----------------------------------------------------------------------------
# Kernels
# ----------------------------------------------------------------------------
def _make_soft_kernel(n_valid, targets_sum_to_one):
    def kernel(x_ref, t_ref, out_ref):
        i = pl.program_id(1)
        bn = x_ref.shape[0]
        row_ok = _row_mask(bn, n_valid)
        shifted, lse = _masked_shifted_lse(x_ref, row_ok)
        t = jnp.where(row_ok, t_ref[...].astype(jnp.float32), 0.0)
        sum_ts = jnp.sum(t * shifted, axis=-1, keepdims=True)
        if targets_sum_to_one:
            per_row = lse - sum_ts
        else:
            sum_t = jnp.sum(t, axis=-1, keepdims=True)
            per_row = lse * sum_t - sum_ts
        per_row = jnp.where(row_ok, per_row, 0.0)
        _accumulate(out_ref, per_row, i)
    return kernel


def _make_hard_kernel(n_valid):
    # NOTE: labels are assumed to be in [0, C) (PyTorch's one_hot would error
    # otherwise); out-of-range labels silently contribute only `lse`.
    def kernel(x_ref, lbl_ref, out_ref):
        i = pl.program_id(1)
        bn, c = x_ref.shape
        row_ok = _row_mask(bn, n_valid)
        shifted, lse = _masked_shifted_lse(x_ref, row_ok)
        lbl = lbl_ref[...]                                       # (bn, 1) i32
        cls = jax.lax.broadcasted_iota(jnp.int32, (1, c), 1)     # (1, C)
        picked = jnp.sum(jnp.where(cls == lbl, shifted, 0.0),
                         axis=-1, keepdims=True)
        per_row = jnp.where(row_ok, lse - picked, 0.0)
        _accumulate(out_ref, per_row, i)
    return kernel


def _make_pair_kernel(n_valid):
    def kernel(x_ref, la_ref, lb_ref, lam_ref, out_ref):
        i = pl.program_id(1)
        bn, c = x_ref.shape
        row_ok = _row_mask(bn, n_valid)
        shifted, lse = _masked_shifted_lse(x_ref, row_ok)
        cls = jax.lax.broadcasted_iota(jnp.int32, (1, c), 1)
        la = la_ref[...]
        lb = lb_ref[...]
        lam = lam_ref[...].astype(jnp.float32)
        pick_a = jnp.sum(jnp.where(cls == la, shifted, 0.0),
                         axis=-1, keepdims=True)
        pick_b = jnp.sum(jnp.where(cls == lb, shifted, 0.0),
                         axis=-1, keepdims=True)
        per_row = lse - lam * pick_a - (1.0 - lam) * pick_b
        per_row = jnp.where(row_ok, per_row, 0.0)
        _accumulate(out_ref, per_row, i)
    return kernel


# ----------------------------------------------------------------------------
# pallas_call wrapper
# ----------------------------------------------------------------------------
def _run(kernel, streams, in_specs, parts, steps, vmem_limit):
    partials = pl.pallas_call(
        kernel,
        out_shape=jax.ShapeDtypeStruct((parts, _SUBLANE, _LANE), jnp.float32),
        grid_spec=pltpu.PrefetchScalarGridSpec(
            num_scalar_prefetch=0,
            grid=(parts, steps),
            in_specs=in_specs,
            out_specs=pl.BlockSpec((1, _SUBLANE, _LANE),
                                   lambda p, i: (p, 0, 0)),
        ),
        compiler_params=pltpu.CompilerParams(
            dimension_semantics=("parallel", "arbitrary"),
            vmem_limit_bytes=vmem_limit,
        ),
    )(*streams)
    return jnp.sum(partials[:, 0, 0])


def cutmix_cross_entropy_loss(logits, target, size_average=True, *,
                              block_n=None, num_partitions=None,
                              targets_sum_to_one=False):
    """JAX/Pallas equivalent of CutMixCrossEntropyLoss.forward.

    logits: (N, C).  target: (N, C) soft labels or (N,) integer class labels.
    Returns a scalar float32 loss (mean over batch if size_average else sum).
    """
    logits = jnp.asarray(logits)
    target = jnp.asarray(target)
    N, C = logits.shape
    hard = target.ndim == 1

    # Only a sub-8-row batch is ever padded (a few rows).  All other ragged
    # tails are handled in-kernel by masking rows >= N of the partial tile.
    n_rows = N
    if N < _SUBLANE:
        pad = _SUBLANE - N
        logits = jnp.pad(logits, ((0, pad), (0, 0)))
        target = (jnp.pad(target, ((0, pad),)) if hard
                  else jnp.pad(target, ((0, pad), (0, 0))))
        n_rows = _SUBLANE

    x_row_bytes = _lane_padded_row_bytes(C, logits.dtype.itemsize)
    if hard:
        per_row_bytes = x_row_bytes + _lane_padded_row_bytes(1, 4)
    else:
        per_row_bytes = x_row_bytes + _lane_padded_row_bytes(
            C, target.dtype.itemsize)

    block_n, parts, steps, total_tiles, vmem_limit = _plan_tiles(
        n_rows, per_row_bytes, block_n=block_n, num_partitions=num_partitions)

    x_spec = _row_spec(block_n, C, steps, total_tiles)
    if hard:
        labels = target.astype(jnp.int32).reshape(n_rows, 1)
        streams = (logits, labels)
        in_specs = [x_spec, _row_spec(block_n, 1, steps, total_tiles)]
        kernel = _make_hard_kernel(N)
    else:
        streams = (logits, target)
        in_specs = [x_spec, _row_spec(block_n, C, steps, total_tiles)]
        kernel = _make_soft_kernel(N, bool(targets_sum_to_one))

    total = _run(kernel, streams, in_specs, parts, steps, vmem_limit)
    denom = jnp.float32(N) if size_average else jnp.float32(1.0)
    return total / denom


def cutmix_pair_cross_entropy_loss(logits, label_a, label_b, lam,
                                   size_average=True, *, block_n=None,
                                   num_partitions=None):
    """Native CutMix path: target = lam*onehot(a) + (1-lam)*onehot(b), without
    materializing or streaming a dense (N, C) soft-target array from HBM."""
    logits = jnp.asarray(logits)
    N, C = logits.shape
    label_a = jnp.asarray(label_a, jnp.int32).reshape(N)
    label_b = jnp.asarray(label_b, jnp.int32).reshape(N)
    lam = jnp.broadcast_to(jnp.asarray(lam, jnp.float32), (N,))

    n_rows = N
    if N < _SUBLANE:
        pad = _SUBLANE - N
        logits = jnp.pad(logits, ((0, pad), (0, 0)))
        label_a = jnp.pad(label_a, ((0, pad),))
        label_b = jnp.pad(label_b, ((0, pad),))
        lam = jnp.pad(lam, ((0, pad),))
        n_rows = _SUBLANE

    per_row_bytes = (_lane_padded_row_bytes(C, logits.dtype.itemsize)
                     + 3 * _lane_padded_row_bytes(1, 4))
    block_n, parts, steps, total_tiles, vmem_limit = _plan_tiles(
        n_rows, per_row_bytes, block_n=block_n, num_partitions=num_partitions)

    narrow = lambda: _row_spec(block_n, 1, steps, total_tiles)
    streams = (logits,
               label_a.reshape(n_rows, 1),
               label_b.reshape(n_rows, 1),
               lam.reshape(n_rows, 1))
    in_specs = [_row_spec(block_n, C, steps, total_tiles),
                narrow(), narrow(), narrow()]
    total = _run(_make_pair_kernel(N), streams, in_specs, parts, steps,
                 vmem_limit)
    denom = jnp.float32(N) if size_average else jnp.float32(1.0)
    return total / denom


# ----------------------------------------------------------------------------
# Reference + demo
# ----------------------------------------------------------------------------
def _reference_loss(logits, target, size_average=True):
    logits = jnp.asarray(logits, jnp.float32)
    target = jnp.asarray(target)
    if target.ndim == 1:
        target = jax.nn.one_hot(target, logits.shape[-1], dtype=jnp.float32)
    logp = jax.nn.log_softmax(logits, axis=1)
    per_row = jnp.sum(-target.astype(jnp.float32) * logp, axis=1)
    return jnp.mean(per_row) if size_average else jnp.sum(per_row)


if __name__ == "__main__":
    key = jax.random.PRNGKey(0)
    k1, k2, k3, k4, k5, k6 = jax.random.split(key, 6)

    N, C = 16, 10
    logits = jax.random.normal(k1, (N, C), jnp.float32) * 2.0
    soft_target = jax.nn.softmax(jax.random.normal(k2, (N, C), jnp.float32),
                                 axis=1)
    hard_target = jax.random.randint(k3, (N,), 0, C)

    loss_soft_mean = cutmix_cross_entropy_loss(logits, soft_target, True)
    loss_soft_sum = cutmix_cross_entropy_loss(logits, soft_target, False)
    loss_soft_fast = cutmix_cross_entropy_loss(logits, soft_target, True,
                                               targets_sum_to_one=True)
    loss_hard_mean = cutmix_cross_entropy_loss(logits, hard_target, True)

    # Ragged tails (partial last tile handled in-kernel, no host-side pad).
    Nr = 13
    loss_rag_hard = cutmix_cross_entropy_loss(logits[:Nr], hard_target[:Nr],
                                              True)
    loss_rag_soft = cutmix_cross_entropy_loss(logits[:Nr], soft_target[:Nr],
                                              True)

    # Sub-8-row batch (only case that still pads, by < 8 rows).
    Nt = 5
    loss_tiny = cutmix_cross_entropy_loss(logits[:Nt], hard_target[:Nt], True)

    # Multi-partition / multi-step grid at a small forced block size.
    N2 = 64
    logits2 = jax.random.normal(k4, (N2, C), jnp.float32)
    soft2 = jax.nn.softmax(logits2 * 0.5, axis=1)
    loss_parts = cutmix_cross_entropy_loss(logits2, soft2, True, block_n=8,
                                           num_partitions=2)

    # Native CutMix pair path vs. the equivalent dense soft target.
    la = jax.random.randint(k5, (N,), 0, C)
    lb = jax.random.randint(k6, (N,), 0, C)
    lam = jax.random.uniform(k2, (N,), jnp.float32)
    dense = (lam[:, None] * jax.nn.one_hot(la, C, dtype=jnp.float32)
             + (1.0 - lam[:, None]) * jax.nn.one_hot(lb, C, dtype=jnp.float32))
    loss_pair = cutmix_pair_cross_entropy_loss(logits, la, lb, lam, True)

    results = (loss_soft_mean, loss_soft_sum, loss_soft_fast, loss_hard_mean,
               loss_rag_hard, loss_rag_soft, loss_tiny, loss_parts, loss_pair)
    jax.block_until_ready(results)

    assert jnp.allclose(loss_soft_mean,
                        _reference_loss(logits, soft_target, True),
                        atol=1e-5, rtol=1e-5)
    assert jnp.allclose(loss_soft_sum,
                        _reference_loss(logits, soft_target, False),
                        atol=1e-4, rtol=1e-5)
    assert jnp.allclose(loss_soft_fast,
                        _reference_loss(logits, soft_target, True),
                        atol=1e-5, rtol=1e-5)
    assert jnp.allclose(loss_hard_mean,
                        _reference_loss(logits, hard_target, True),
                        atol=1e-5, rtol=1e-5)
    assert jnp.allclose(loss_rag_hard,
                        _reference_loss(logits[:Nr], hard_target[:Nr], True),
                        atol=1e-5, rtol=1e-5)
    assert jnp.allclose(loss_rag_soft,
                        _reference_loss(logits[:Nr], soft_target[:Nr], True),
                        atol=1e-5, rtol=1e-5)
    assert jnp.allclose(loss_tiny,
                        _reference_loss(logits[:Nt], hard_target[:Nt], True),
                        atol=1e-5, rtol=1e-5)
    assert jnp.allclose(loss_parts,
                        _reference_loss(logits2, soft2, True),
                        atol=1e-5, rtol=1e-5)
    assert jnp.allclose(loss_pair,
                        _reference_loss(logits, dense, True),
                        atol=1e-5, rtol=1e-5)

    print("KERNEL_OK")
</pallas_src>

<mosaic_0001>
module attributes {stable_mosaic.version = 11 : i64} {
  func.func @kernel(%arg0: i32, %arg1: i32, %arg2: memref<16x10xf32, #tpu.memory_space<vmem>>, %arg3: memref<16x10xf32, #tpu.memory_space<vmem>>, %arg4: memref<1x8x128xf32, #tpu.memory_space<vmem>>) attributes {dimension_semantics = [#tpu.dimension_semantics<parallel>, #tpu.dimension_semantics<arbitrary>], iteration_bounds = array<i64: 1, 1>, scalar_prefetch = 0 : i64, scratch_operands = 0 : i64, tpu.core_type = #tpu.core_type<tc>, window_params = [{transform_indices = @transform_0, window_bounds = array<i64: 16, 10>}, {transform_indices = @transform_1, window_bounds = array<i64: 16, 10>}, {transform_indices = @transform_2, window_bounds = array<i64: 1, 8, 128>}]} {
    %c1_i32 = arith.constant 1 : i32
    %0 = arith.muli %arg0, %c1_i32 : i32
    %1 = arith.addi %0, %arg1 : i32
    %c16_i32 = arith.constant 16 : i32
    %2 = arith.muli %1, %c16_i32 : i32
    %3 = tpu.iota {dimensions = array<i32: 0>} : vector<16x1xi32>
    %4 = vector.broadcast %2 : i32 to vector<16x1xi32>
    %5 = arith.addi %4, %3 : vector<16x1xi32>
    %c16_i32_0 = arith.constant 16 : i32
    %6 = vector.broadcast %c16_i32_0 : i32 to vector<16x1xi32>
    %7 = arith.cmpi slt, %5, %6 : vector<16x1xi32>
    %c0 = arith.constant 0 : index
    %c0_1 = arith.constant 0 : index
    %8 = vector.load %arg2[%c0, %c0_1] : memref<16x10xf32, #tpu.memory_space<vmem>>, vector<16x10xf32>
    %cst = arith.constant 0.000000e+00 : f32
    %9 = vector.shape_cast %7 : vector<16x1xi1> to vector<16x1xi1>
    %10 = vector.broadcast %9 : vector<16x1xi1> to vector<16x10xi1>
    %11 = vector.broadcast %cst : f32 to vector<16x10xf32>
    %12 = arith.select %10, %8, %11 : vector<16x10xi1>, vector<16x10xf32>
    %cst_2 = arith.constant dense<0xFF800000> : vector<16xf32>
    %13 = vector.multi_reduction <maximumf>, %12, %cst_2 [1] : vector<16x10xf32> to vector<16xf32>
    %14 = vector.shape_cast %13 : vector<16xf32> to vector<16x1xf32>
    %15 = vector.broadcast %14 : vector<16x1xf32> to vector<16x10xf32>
    %16 = arith.subf %12, %15 : vector<16x10xf32>
    %17 = math.exp %16 : vector<16x10xf32>
    %cst_3 = arith.constant dense<0.000000e+00> : vector<16xf32>
    %18 = vector.multi_reduction <add>, %17, %cst_3 [1] : vector<16x10xf32> to vector<16xf32>
    %19 = vector.shape_cast %18 : vector<16xf32> to vector<16x1xf32>
    %20 = math.log %19 : vector<16x1xf32>
    %c0_4 = arith.constant 0 : index
    %c0_5 = arith.constant 0 : index
    %21 = vector.load %arg3[%c0_4, %c0_5] : memref<16x10xf32, #tpu.memory_space<vmem>>, vector<16x10xf32>
    %cst_6 = arith.constant 0.000000e+00 : f32
    %22 = vector.shape_cast %7 : vector<16x1xi1> to vector<16x1xi1>
    %23 = vector.broadcast %22 : vector<16x1xi1> to vector<16x10xi1>
    %24 = vector.broadcast %cst_6 : f32 to vector<16x10xf32>
    %25 = arith.select %23, %21, %24 : vector<16x10xi1>, vector<16x10xf32>
    %26 = arith.mulf %25, %16 : vector<16x10xf32>
    %cst_7 = arith.constant dense<0.000000e+00> : vector<16xf32>
    %27 = vector.multi_reduction <add>, %26, %cst_7 [1] : vector<16x10xf32> to vector<16xf32>
    %28 = vector.shape_cast %27 : vector<16xf32> to vector<16x1xf32>
    %cst_8 = arith.constant dense<0.000000e+00> : vector<16xf32>
    %29 = vector.multi_reduction <add>, %25, %cst_8 [1] : vector<16x10xf32> to vector<16xf32>
    %30 = vector.shape_cast %29 : vector<16xf32> to vector<16x1xf32>
    %31 = arith.mulf %20, %30 : vector<16x1xf32>
    %32 = arith.subf %31, %28 : vector<16x1xf32>
    %cst_9 = arith.constant 0.000000e+00 : f32
    %33 = vector.broadcast %cst_9 : f32 to vector<16x1xf32>
    %34 = arith.select %7, %32, %33 : vector<16x1xi1>, vector<16x1xf32>
    %c0_i32 = arith.constant 0 : i32
    %35 = arith.cmpi eq, %arg1, %c0_i32 : i32
    %36 = arith.extui %35 : i1 to i32
    %c0_i32_10 = arith.constant 0 : i32
    %37 = arith.cmpi ne, %36, %c0_i32_10 : i32
    scf.if %37 {
      %cst_18 = arith.constant 0.000000e+00 : f32
      %46 = vector.broadcast %cst_18 : f32 to vector<1x8x128xf32>
      %c0_19 = arith.constant 0 : index
      %c0_20 = arith.constant 0 : index
      %c0_21 = arith.constant 0 : index
      %47 = vector.load %arg4[%c0_19, %c0_20, %c0_21] : memref<1x8x128xf32, #tpu.memory_space<vmem>>, vector<1x8x128xf32>
      tpu.vector_store %arg4[%c0_19, %c0_20, %c0_21], %46 {strides = array<i32>} : memref<1x8x128xf32, #tpu.memory_space<vmem>>, vector<1x8x128xf32>,
    } else {
    }
    %c0_11 = arith.constant 0 : index
    %c0_12 = arith.constant 0 : index
    %c0_13 = arith.constant 0 : index
    %38 = vector.load %arg4[%c0_11, %c0_12, %c0_13] : memref<1x8x128xf32, #tpu.memory_space<vmem>>, vector<1x8x128xf32>
    %39 = vector.shape_cast %34 : vector<16x1xf32> to vector<1x16x1xf32>
    %cst_14 = arith.constant dense<0.000000e+00> : vector<1xf32>
    %40 = vector.multi_reduction <add>, %39, %cst_14 [1, 2] : vector<1x16x1xf32> to vector<1xf32>
    %41 = vector.shape_cast %40 : vector<1xf32> to vector<1x1x1xf32>
    %42 = vector.extract %41[0, 0, 0] : f32 from vector<1x1x1xf32>
    %43 = vector.broadcast %42 : f32 to vector<1x8x128xf32>
    %44 = arith.addf %38, %43 : vector<1x8x128xf32>
    %c0_15 = arith.constant 0 : index
    %c0_16 = arith.constant 0 : index
    %c0_17 = arith.constant 0 : index
    %45 = vector.load %arg4[%c0_15, %c0_16, %c0_17] : memref<1x8x128xf32, #tpu.memory_space<vmem>>, vector<1x8x128xf32>
    tpu.vector_store %arg4[%c0_15, %c0_16, %c0_17], %44 {strides = array<i32>} : memref<1x8x128xf32, #tpu.memory_space<vmem>>, vector<1x8x128xf32>,
    return
  }
  func.func @transform_0(%arg0: i32, %arg1: i32) -> (i32, i32) {
    %c1_i32 = arith.constant 1 : i32
    %0 = arith.muli %arg0, %c1_i32 : i32
    %1 = arith.addi %0, %arg1 : i32
    %c0_i32 = arith.constant 0 : i32
    %2 = arith.minsi %1, %c0_i32 : i32
    %c0_i32_0 = arith.constant 0 : i32
    %c0_i32_1 = arith.constant 0 : i32
    return %2, %c0_i32_0 : i32, i32
  }
  func.func @transform_1(%arg0: i32, %arg1: i32) -> (i32, i32) {
    %c1_i32 = arith.constant 1 : i32
    %0 = arith.muli %arg0, %c1_i32 : i32
    %1 = arith.addi %0, %arg1 : i32
    %c0_i32 = arith.constant 0 : i32
    %2 = arith.minsi %1, %c0_i32 : i32
    %c0_i32_0 = arith.constant 0 : i32
    %c0_i32_1 = arith.constant 0 : i32
    return %2, %c0_i32_0 : i32, i32
  }
  func.func @transform_2(%arg0: i32, %arg1: i32) -> (i32, i32, i32) {
    %c0_i32 = arith.constant 0 : i32
    %c0_i32_0 = arith.constant 0 : i32
    %c0_i32_1 = arith.constant 0 : i32
    return %arg0, %c0_i32, %c0_i32_0 : i32, i32, i32
  }
}

</mosaic_0001>

<llo_original>
// kernel: tpu_custom_call.1
$region0: #{tpu_custom_call.1}
  #allocation0 [shape = 'u32[]', space=smem, size = 0x4, offset = 0x4, fixed_abs, tag = 'smem constant byte address 0x4 - core index']
  #allocation1 [shape = 'u32[144,128]{1,0:T(1,128)}', space=vmem, size = 0x12000, scoped, tag = 'internal scratch']
  %s0 = inlined_call_operand.hbm [shape: f32[16,10], index: 0, kind: input, shape index: {}]
  %s1 = inlined_call_operand.hbm [shape: f32[16,10], index: 1, kind: input, shape index: {}]
  %s2 = inlined_call_operand.hbm [shape: f32[1,8,128], index: 2, kind: output, shape index: {}]
  %s3 = sld [smem:[#allocation0]]
  $region30: #{tpu_custom_call.1} parent=0
    _
  %s5 = ssub.s32 1, %s3
  %s6 = scalar_select 0, %s5, %s3
  $region1: #{tpu_custom_call.1} parent=0
    #allocation2 [shape = 'u8[8192]{0}', space=vmem, size = 0x2000, scoped, tag = 'input window, operand 0, single buffered']
    #allocation3 [shape = 's32[1]{0}', space=sflag, size = 0x4, scoped, tag = 'scoped memory for tpu_custom_call.1']
    #allocation4 [shape = 's32[1]{0}', space=sflag, size = 0x4, scoped, tag = 'scoped memory for tpu_custom_call.1']
    #allocation5 [shape = 'u8[8192]{0}', space=vmem, size = 0x2000, scoped, tag = 'input window, operand 1, single buffered']
    #allocation6 [shape = 's32[1]{0}', space=sflag, size = 0x4, scoped, tag = 'scoped memory for tpu_custom_call.1']
    #allocation7 [shape = 'u8[4096]{0}', space=vmem, size = 0x1000, scoped, tag = 'output window, operand 0, single buffered']
    %7 = vsyncpa [#allocation3], 0
    %8 = vsyncpa [#allocation6], 0
    %9 = vsyncpa [#allocation4], 0
    // Predicated region
    $region2: #{tpu_custom_call.1} parent=1 // pred_check
      _
    $region3: #{tpu_custom_call.1} parent=1 // pred_check_branch
      %11 = sbr.rel (0) target = $region5
    $region4: #{tpu_custom_call.1} parent=1 // pred_region
      %s12 = sadd.s32 0, 0
      %p13 = scmp.lt.s32.totalorder %s12, 0
      %s14 = scalar_select %p13, %s12, 0
      %s15 = smul.u32 2, %s14
      %s17 = ssub.s32 256, 256
      %18 = vsyncadd [#allocation3], %s17
      %s19 = smul.addr %s15, 128
      %s20 = scalar_lea.hbm %s0, %s19
      %s21 = sshll.u32 [#allocation2], 4
      %s22 = int_to_ptr.vmem [resolvable:$true] %s21
      %27 = dma.hbm_to_vmem [thread:$0]  %s20, 256, %s22, [#allocation3], 128, 128, 8
    $region5: #{tpu_custom_call.1} parent=1 // pred_fallthru
      _
    // Predicated region
    $region6: #{tpu_custom_call.1} parent=1 // pred_check
      _
    $region7: #{tpu_custom_call.1} parent=1 // pred_check_branch
      %29 = sbr.rel (0) target = $region9
    $region8: #{tpu_custom_call.1} parent=1 // pred_region
      %s30 = sadd.s32 0, 0
      %p31 = scmp.lt.s32.totalorder %s30, 0
      %s32 = scalar_select %p31, %s30, 0
      %s33 = smul.u32 2, %s32
      %s35 = ssub.s32 256, 256
      %36 = vsyncadd [#allocation6], %s35
      %s37 = smul.addr %s33, 128
      %s38 = scalar_lea.hbm %s1, %s37
      %s39 = sshll.u32 [#allocation5], 4
      %s40 = int_to_ptr.vmem [resolvable:$true] %s39
      %45 = dma.hbm_to_vmem [thread:$0]  %s38, 256, %s40, [#allocation6], 128, 128, 8
    $region9: #{tpu_custom_call.1} parent=1 // pred_fallthru
      _
    // Predicated region
    $region10: #{tpu_custom_call.1} parent=1 // pred_check
      _
    $region11: #{tpu_custom_call.1} parent=1 // pred_check_branch
      %47 = sbr.rel (0) target = $region13
    $region12: #{tpu_custom_call.1} parent=1 // pred_region
      %48 = dma.done [#allocation3], 256
    $region13: #{tpu_custom_call.1} parent=1 // pred_fallthru
      _
    // Predicated region
    $region14: #{tpu_custom_call.1} parent=1 // pred_check
      _
    $region15: #{tpu_custom_call.1} parent=1 // pred_check_branch
      %50 = sbr.rel (0) target = $region17
    $region16: #{tpu_custom_call.1} parent=1 // pred_region
      %51 = dma.done [#allocation6], 256
    $region17: #{tpu_custom_call.1} parent=1 // pred_fallthru
      _
    %s52 = sadd.s32 0, 0
    %p53 = scmp.lt.s32.totalorder %s52, 0
    %s54 = scalar_select %p53, %s52, 0
    %s55 = smul.u32 2, %s54
    %s56 = sadd.s32 0, 0
    %p57 = scmp.lt.s32.totalorder %s56, 0
    %s58 = scalar_select %p57, %s56, 0
    %s59 = smul.u32 2, %s58
    %s60 = sadd.s32 0, 0
    %s61 = smul.u32 %s60, 16
    %v62 = vlaneseq
    %v63 = vshrl.u32 %v62, 7
    %v64 = vadd.s32 %v63, 8
    %v65 = vstv %s61
    %v66 = vadd.s32 %v65, %v63
    %v67 = vadd.s32 %v65, %v64
    %vm68 = vcmp.lt.s32.totalorder %v66, 16
    %vm69 = vcmp.lt.s32.totalorder %v67, 16
    %v70 = vld [vmem:[#allocation2] sm:$0xff]
    %v71 = vld [vmem:[#allocation2 + $0x8] sm:$0xff]
    %v72 = vsel %vm68, 1, 0
    %v73 = vsel %vm69, 1, 0
    %vm74 = vcmp.eq.s32.totalorder %v72, 1
    %vm75 = vcmp.eq.s32.totalorder %v73, 1
    %v76 = vsel %vm74, %v70, 0.0
    %v77 = vsel %vm75, %v71, 0.0
    %vm78 = vcmask 80896
    %v79 = vsel %vm78, %v76, -inf
    %80 = vmax.xlane.f32.xlu0 %v79
    %v81 = vpop.xlane.xlu0 %80
    %v82 = vsel %vm78, %v77, -inf
    %83 = vmax.xlane.f32.xlu0 %v82
    %v84 = vpop.xlane.xlu0 %83
    %v85 = vsub.f32 %v76, %v81
    %v86 = vsub.f32 %v77, %v84
    %v87 = vmul.f32 %v85, 1.442695
    %v88 = vpow.pop %v87
    %v89 = vmul.f32 %v86, 1.442695
    %v90 = vpow.pop %v89
    %v91 = vsel %vm78, %v88, 0.0
    %92 = vadd.xlane.f32.xlu0 %v91
    %v93 = vpop.xlane.xlu0 %92
    %v94 = vsel %vm78, %v90, 0.0
    %95 = vadd.xlane.f32.xlu0 %v94
    %v96 = vpop.xlane.xlu0 %95
    %v97 = vlog2.pop %v93
    %v98 = vmul.f32 %v97, 0.6931472
    %v99 = vlog2.pop %v96
    %v100 = vmul.f32 %v99, 0.6931472
    %v101 = vld [vmem:[#allocation5] sm:$0xff]
    %v102 = vld [vmem:[#allocation5 + $0x8] sm:$0xff]
    %v103 = vsel %vm74, %v101, 0.0
    %v104 = vsel %vm75, %v102, 0.0
    %v105 = vmul.f32 %v103, %v85
    %v106 = vmul.f32 %v104, %v86
    %v107 = vsel %vm78, %v105, 0.0
    %108 = vadd.xlane.f32.xlu0 %v107
    %v109 = vpop.xlane.xlu0 %108
    %v110 = vsel %vm78, %v106, 0.0
    %111 = vadd.xlane.f32.xlu0 %v110
    %v112 = vpop.xlane.xlu0 %111
    %v113 = vsel %vm78, %v103, 0.0
    %114 = vadd.xlane.f32.xlu0 %v113
    %v115 = vpop.xlane.xlu0 %114
    %v116 = vsel %vm78, %v104, 0.0
    %117 = vadd.xlane.f32.xlu0 %v116
    %v118 = vpop.xlane.xlu0 %117
    %v119 = vmul.f32 %v98, %v115
    %v120 = vmul.f32 %v100, %v118
    %v121 = vsub.f32 %v119, %v109
    %v122 = vsub.f32 %v120, %v112
    %v123 = vsel %vm68, %v121, 0.0
    %v124 = vsel %vm69, %v122, 0.0
    %p125 = scmp.eq.s32.totalorder 0, 0
    // Predicated region
    $region18: #{tpu_custom_call.1} parent=1 // pred_check
      %p126 = pneg %p125
    $region19: #{tpu_custom_call.1} parent=1 // pred_check_branch
      %128 = sbr.rel (%p126) target = $region21
    $region20: #{tpu_custom_call.1} parent=1 // pred_region
      %129 = vst [vmem:[#allocation7] sm:$0xff] 0.0
    $region21: #{tpu_custom_call.1} parent=1 // pred_fallthru
      _
    %v130 = vld [vmem:[#allocation7] sm:$0xff]
    %vm131 = vcmask 7168
    %v132 = vsel %vm131, %v123, 0.0
    %v133 = vsel %vm131, %v124, 0.0
    %v134 = vadd.f32 %v132, %v133
    %135 = vadd.xlane.f32.xlu0 %v134
    %v136 = vpop.xlane.xlu0 %135
    %v137 = vrot.slane %v136, 4
    %v138 = vadd.f32 %v136, %v137
    %v139 = vrot.slane %v138, 2
    %v140 = vadd.f32 %v138, %v139
    %v141 = vrot.slane %v140, 1
    %v142 = vadd.f32 %v140, %v141
    %s143 = vtos %v142
    %v144 = vstv %s143
    %v145 = vadd.f32 %v130, %v144
    %146 = vst [vmem:[#allocation7] sm:$0xff] %v145
    // Predicated region
    $region22: #{tpu_custom_call.1} parent=1 // pred_check
      _
    $region23: #{tpu_custom_call.1} parent=1 // pred_check_branch
      %148 = sbr.rel (0) target = $region25
    $region24: #{tpu_custom_call.1} parent=1 // pred_region
      %s150 = ssub.s32 128, 128
      %151 = vsyncadd [#allocation4], %s150
      %s153 = sshll.u32 [#allocation7], 4
      %s154 = int_to_ptr.vmem [resolvable:$true] %s153
      %156 = dma.vmem_to_hbm [thread:$0]  %s154, 128, %s2, [#allocation4]
    $region25: #{tpu_custom_call.1} parent=1 // pred_fallthru
      _
    // Predicated region
    $region26: #{tpu_custom_call.1} parent=1 // pred_check
      _
    $region27: #{tpu_custom_call.1} parent=1 // pred_check_branch
      %158 = sbr.rel (0) target = $region29
    $region28: #{tpu_custom_call.1} parent=1 // pred_region
      %159 = dma.done [#allocation4], 128
    $region29: #{tpu_custom_call.1} parent=1 // pred_fallthru
      _
    %160 = vsyncpa [#allocation3], 1
    %161 = vsyncpa [#allocation6], 1
    %162 = vsyncpa [#allocation4], 1

</llo_original>
